<compile_context>
chip_gen: v5e
topology: v5e:2x2
jax: 0.10.0
libtpu: 0.0.40
codegen_flags: <defaults>
</compile_context>

<pallas_src>
import jax
import jax.numpy as jnp
from jax.experimental import pallas as pl
from jax.experimental.pallas import tpu as pltpu


def _round_up(x: int, m: int) -> int:
    return ((x + m - 1) // m) * m


# ----------------------------------------------------------------------------
# Kernel: whole MLP fused.  refs = (x, w0, b0, w1, b1, ..., out).
#   x:   (TB, in_dim)  batch-major tile (native PyTorch layout, no wrapper .T)
#   w_j: (out_j, in_j) VMEM-resident, b_j: (out_j, 1) VMEM-resident
#   out: (out_dim, TB) feature-major tile (lane-dense stores)
# ----------------------------------------------------------------------------
def _make_mlp_kernel(n_layers: int, activation: str, act_dtype):
    def act(h):
        if act_dtype is not None:
            h = h.astype(act_dtype)          # opt-in bf16 EUP path (v6e/v7x)
        if activation == "tanh":
            h = jax.lax.tanh(h)              # native EUP vtanh
        else:
            h = jnp.maximum(h, 0.0)          # VPU
        if act_dtype is not None:
            h = h.astype(jnp.float32)
        return h

    def kernel(*refs):
        x_ref = refs[0]
        o_ref = refs[-1]
        params = refs[1:-1]                  # (w0, b0, w1, b1, ...)

        # Layer 0: contract over in_dim of BOTH operands:
        #   (out0, in) x (TB, in) -> (out0, TB).  The batch->lane relayout
        # happens in-kernel (XLU), hidden under the EUP-bound activations.
        h = jax.lax.dot_general(
            params[0][...], x_ref[...],
            (((1,), (1,)), ((), ())),
            preferred_element_type=jnp.float32,
        ) + params[1][...]
        if n_layers > 1:
            h = act(h)

        for j in range(1, n_layers):
            w = params[2 * j][...]           # (out_j, in_j)
            b = params[2 * j + 1][...]       # (out_j, 1)
            h = jnp.dot(w, h, preferred_element_type=jnp.float32) + b
            if j != n_layers - 1:
                h = act(h)

        o_ref[...] = h.astype(o_ref.dtype)

    return kernel


def densenet_forward_pallas(x, weights, biases, activation="tanh",
                            block_batch=8192, act_dtype=None):
    """DenseNet MLP forward in a single batch-tiled Pallas kernel.

    x:        (batch, layers[0]) float32        (native PyTorch layout)
    weights:  list of (layers[j], layers[j+1])  float32  (x @ W layout)
    biases:   list of (1, layers[j+1])          float32
    act_dtype: None (f32, default) or jnp.bfloat16 (opt-in, v6e/v7x only,
               exceeds 1e-5 tolerance).
    Returns   (batch, layers[-1]) float32
    """
    if activation not in ("tanh", "relu"):
        raise ValueError(f"{activation} is not supported")

    n_layers = len(weights)
    batch, in_dim = x.shape
    out_dim = weights[-1].shape[1]

    # Batch tile: multiple of 512 (256-wide MXU chunking on v6e/v7x, 128-lane
    # alignment on v5e), capped at block_batch so VMEM (incl. the 4->128 lane
    # padding of the (TB, 4) input block) stays well under the scoped limit.
    tb = min(block_batch, _round_up(batch, 512))
    padded = _round_up(batch, tb)
    grid = (padded // tb,)

    # Input kept batch-major; pad only when the batch doesn't tile evenly.
    if padded != batch:
        x = jnp.pad(x, ((0, padded - batch), (0, 0)))

    operands = [x]
    in_specs = [pl.BlockSpec((tb, in_dim), lambda i: (i, 0))]
    param_bytes = 0
    for w, b in zip(weights, biases):
        w_t = w.T                                        # (out_j, in_j)
        b_t = b.reshape(-1, 1)                           # (out_j, 1)
        operands.append(w_t)
        operands.append(b_t)
        # Full blocks, same index every grid step -> stay resident in VMEM.
        in_specs.append(pl.BlockSpec(w_t.shape, lambda i: (0, 0)))
        in_specs.append(pl.BlockSpec(b_t.shape, lambda i: (0, 0)))
        param_bytes += 4 * (w_t.size + b_t.size)

    kernel = _make_mlp_kernel(n_layers, activation, act_dtype)

    # Advisory cost hint for XLA scheduling around the custom call.
    dims = [in_dim] + [w.shape[1] for w in weights]
    flops = 2 * padded * sum(dims[j] * dims[j + 1] for j in range(n_layers))
    transcendentals = (padded * sum(dims[1:-1])) if activation == "tanh" else 0
    bytes_accessed = 4 * padded * (in_dim + out_dim) + param_bytes
    cost = pl.CostEstimate(flops=flops, transcendentals=transcendentals,
                           bytes_accessed=bytes_accessed)

    out_t = pl.pallas_call(
        kernel,
        out_shape=jax.ShapeDtypeStruct((out_dim, padded), x.dtype),
        grid=grid,
        in_specs=in_specs,
        out_specs=pl.BlockSpec((out_dim, tb), lambda i: (0, i)),
        compiler_params=pltpu.CompilerParams(
            dimension_semantics=("parallel",),   # shards batch tiles across TCs (v7x)
        ),
        cost_estimate=cost,
    )(*operands)

    # Tiny (out_dim, batch) -> (batch, out_dim) relayout stays in the consumer.
    return out_t[:, :batch].T


# ----------------------------------------------------------------------------
# Deterministic parameter init (mirrors PyTorch nn.Linear default:
# U(-1/sqrt(fan_in), 1/sqrt(fan_in)) for both weight and bias).
# ----------------------------------------------------------------------------
def init_densenet_params(key, layer_sizes):
    weights, biases = [], []
    for j in range(len(layer_sizes) - 1):
        fan_in, fan_out = layer_sizes[j], layer_sizes[j + 1]
        key, kw, kb = jax.random.split(key, 3)
        bound = 1.0 / jnp.sqrt(jnp.float32(fan_in))
        # Stored as (in, out) so the reference does h @ W (== PyTorch x @ W^T).
        w = jax.random.uniform(kw, (fan_in, fan_out), jnp.float32, -bound, bound)
        b = jax.random.uniform(kb, (1, fan_out), jnp.float32, -bound, bound)
        weights.append(w)
        biases.append(b)
    return weights, biases


# Pure-JAX reference for correctness checking.
def densenet_forward_ref(x, weights, biases, activation="tanh"):
    h = x
    n_layers = len(weights)
    for j, (w, b) in enumerate(zip(weights, biases)):
        h = h @ w + b
        if j != n_layers - 1:
            h = jnp.tanh(h) if activation == "tanh" else jnp.maximum(h, 0.0)
    return h


if __name__ == "__main__":
    # DenseNet([4, 32, 32, 2], 'tanh')
    layer_sizes = [4, 32, 32, 2]
    activation = "tanh"
    batch = 8

    key = jax.random.PRNGKey(0)
    key, kx = jax.random.split(key)
    x = jax.random.normal(kx, (batch, layer_sizes[0]), jnp.float32)

    weights, biases = init_densenet_params(key, layer_sizes)

    out = densenet_forward_pallas(x, weights, biases, activation)
    out = jax.block_until_ready(out)

    ref = densenet_forward_ref(x, weights, biases, activation)
    assert out.shape == (batch, layer_sizes[-1])
    assert jnp.allclose(out, ref, atol=1e-5, rtol=1e-5), (
        f"max abs err = {jnp.max(jnp.abs(out - ref))}"
    )

    # Multi-tile batch: exercises grid > 1, batch padding, and (on v7x) the
    # parallel batch axis feeding both TensorCores.
    big_batch = 20000  # not a multiple of the 8192 tile -> exercises padding
    key, kb = jax.random.split(key)
    xb = jax.random.normal(kb, (big_batch, layer_sizes[0]), jnp.float32)
    out_b = jax.block_until_ready(
        densenet_forward_pallas(xb, weights, biases, activation))
    ref_b = densenet_forward_ref(xb, weights, biases, activation)
    assert out_b.shape == (big_batch, layer_sizes[-1])
    assert jnp.allclose(out_b, ref_b, atol=1e-5, rtol=1e-5), (
        f"max abs err = {jnp.max(jnp.abs(out_b - ref_b))}"
    )

    print("KERNEL_OK")
</pallas_src>

<mosaic_0001>
module attributes {stable_mosaic.version = 11 : i64} {
  func.func @kernel(%arg0: i32, %arg1: memref<512x4xf32, #tpu.memory_space<vmem>>, %arg2: memref<32x4xf32, #tpu.memory_space<vmem>>, %arg3: memref<32x1xf32, #tpu.memory_space<vmem>>, %arg4: memref<32x32xf32, #tpu.memory_space<vmem>>, %arg5: memref<32x1xf32, #tpu.memory_space<vmem>>, %arg6: memref<2x32xf32, #tpu.memory_space<vmem>>, %arg7: memref<2x1xf32, #tpu.memory_space<vmem>>, %arg8: memref<2x512xf32, #tpu.memory_space<vmem>>) attributes {dimension_semantics = [#tpu.dimension_semantics<parallel>], iteration_bounds = array<i64: 1>, scalar_prefetch = 0 : i64, scratch_operands = 0 : i64, tpu.core_type = #tpu.core_type<tc>, window_params = [{transform_indices = @transform_0, window_bounds = array<i64: 512, 4>}, {pipeline_mode = #tpu.pipeline_mode<synchronous>, transform_indices = @transform_1, window_bounds = array<i64: 32, 4>}, {pipeline_mode = #tpu.pipeline_mode<synchronous>, transform_indices = @transform_2, window_bounds = array<i64: 32, 1>}, {pipeline_mode = #tpu.pipeline_mode<synchronous>, transform_indices = @transform_3, window_bounds = array<i64: 32, 32>}, {pipeline_mode = #tpu.pipeline_mode<synchronous>, transform_indices = @transform_4, window_bounds = array<i64: 32, 1>}, {pipeline_mode = #tpu.pipeline_mode<synchronous>, transform_indices = @transform_5, window_bounds = array<i64: 2, 32>}, {pipeline_mode = #tpu.pipeline_mode<synchronous>, transform_indices = @transform_6, window_bounds = array<i64: 2, 1>}, {transform_indices = @transform_7, window_bounds = array<i64: 2, 512>}]} {
    %c0 = arith.constant 0 : index
    %c0_0 = arith.constant 0 : index
    %0 = vector.load %arg2[%c0, %c0_0] : memref<32x4xf32, #tpu.memory_space<vmem>>, vector<32x4xf32>
    %c0_1 = arith.constant 0 : index
    %c0_2 = arith.constant 0 : index
    %1 = vector.load %arg1[%c0_1, %c0_2] : memref<512x4xf32, #tpu.memory_space<vmem>>, vector<512x4xf32>
    %cst = arith.constant dense<0.000000e+00> : vector<32x512xf32>
    %2 = tpu.matmul %0, %1, %cst {dimension_numbers = #tpu.dot_dimension_numbers<[1], [1], [0], [0], [0, 0, 1, 0], [], []>} : vector<32x4xf32>, vector<512x4xf32>, vector<32x512xf32> -> vector<32x512xf32>
    %c0_3 = arith.constant 0 : index
    %c0_4 = arith.constant 0 : index
    %3 = vector.load %arg3[%c0_3, %c0_4] : memref<32x1xf32, #tpu.memory_space<vmem>>, vector<32x1xf32>
    %4 = vector.broadcast %3 : vector<32x1xf32> to vector<32x512xf32>
    %5 = arith.addf %2, %4 : vector<32x512xf32>
    %6 = math.tanh %5 : vector<32x512xf32>
    %c0_5 = arith.constant 0 : index
    %c0_6 = arith.constant 0 : index
    %7 = vector.load %arg4[%c0_5, %c0_6] : memref<32x32xf32, #tpu.memory_space<vmem>>, vector<32x32xf32>
    %c0_7 = arith.constant 0 : index
    %c0_8 = arith.constant 0 : index
    %8 = vector.load %arg5[%c0_7, %c0_8] : memref<32x1xf32, #tpu.memory_space<vmem>>, vector<32x1xf32>
    %cst_9 = arith.constant dense<0.000000e+00> : vector<32x512xf32>
    %9 = tpu.matmul %7, %6, %cst_9 {dimension_numbers = #tpu.dot_dimension_numbers<[1], [0], [0], [1], [0, 0, 1, 1], [], []>} : vector<32x32xf32>, vector<32x512xf32>, vector<32x512xf32> -> vector<32x512xf32>
    %10 = vector.broadcast %8 : vector<32x1xf32> to vector<32x512xf32>
    %11 = arith.addf %9, %10 : vector<32x512xf32>
    %12 = math.tanh %11 : vector<32x512xf32>
    %c0_10 = arith.constant 0 : index
    %c0_11 = arith.constant 0 : index
    %13 = vector.load %arg6[%c0_10, %c0_11] : memref<2x32xf32, #tpu.memory_space<vmem>>, vector<2x32xf32>
    %c0_12 = arith.constant 0 : index
    %c0_13 = arith.constant 0 : index
    %14 = vector.load %arg7[%c0_12, %c0_13] : memref<2x1xf32, #tpu.memory_space<vmem>>, vector<2x1xf32>
    %cst_14 = arith.constant dense<0.000000e+00> : vector<2x512xf32>
    %15 = tpu.matmul %13, %12, %cst_14 {dimension_numbers = #tpu.dot_dimension_numbers<[1], [0], [0], [1], [0, 0, 1, 1], [], []>} : vector<2x32xf32>, vector<32x512xf32>, vector<2x512xf32> -> vector<2x512xf32>
    %16 = vector.broadcast %14 : vector<2x1xf32> to vector<2x512xf32>
    %17 = arith.addf %15, %16 : vector<2x512xf32>
    %c0_15 = arith.constant 0 : index
    %c0_16 = arith.constant 0 : index
    %18 = vector.load %arg8[%c0_15, %c0_16] : memref<2x512xf32, #tpu.memory_space<vmem>>, vector<2x512xf32>
    tpu.vector_store %arg8[%c0_15, %c0_16], %17 {strides = array<i32>} : memref<2x512xf32, #tpu.memory_space<vmem>>, vector<2x512xf32>,
    return
  }
  func.func @transform_0(%arg0: i32) -> (i32, i32) {
    %c0_i32 = arith.constant 0 : i32
    %c0_i32_0 = arith.constant 0 : i32
    return %arg0, %c0_i32 : i32, i32
  }
  func.func @transform_1(%arg0: i32) -> (i32, i32) {
    %c0_i32 = arith.constant 0 : i32
    %c0_i32_0 = arith.constant 0 : i32
    %c0_i32_1 = arith.constant 0 : i32
    return %c0_i32, %c0_i32_0 : i32, i32
  }
  func.func @transform_2(%arg0: i32) -> (i32, i32) {
    %c0_i32 = arith.constant 0 : i32
    %c0_i32_0 = arith.constant 0 : i32
    %c0_i32_1 = arith.constant 0 : i32
    return %c0_i32, %c0_i32_0 : i32, i32
  }
  func.func @transform_3(%arg0: i32) -> (i32, i32) {
    %c0_i32 = arith.constant 0 : i32
    %c0_i32_0 = arith.constant 0 : i32
    %c0_i32_1 = arith.constant 0 : i32
    return %c0_i32, %c0_i32_0 : i32, i32
  }
  func.func @transform_4(%arg0: i32) -> (i32, i32) {
    %c0_i32 = arith.constant 0 : i32
    %c0_i32_0 = arith.constant 0 : i32
    %c0_i32_1 = arith.constant 0 : i32
    return %c0_i32, %c0_i32_0 : i32, i32
  }
  func.func @transform_5(%arg0: i32) -> (i32, i32) {
    %c0_i32 = arith.constant 0 : i32
    %c0_i32_0 = arith.constant 0 : i32
    %c0_i32_1 = arith.constant 0 : i32
    return %c0_i32, %c0_i32_0 : i32, i32
  }
  func.func @transform_6(%arg0: i32) -> (i32, i32) {
    %c0_i32 = arith.constant 0 : i32
    %c0_i32_0 = arith.constant 0 : i32
    %c0_i32_1 = arith.constant 0 : i32
    return %c0_i32, %c0_i32_0 : i32, i32
  }
  func.func @transform_7(%arg0: i32) -> (i32, i32) {
    %c0_i32 = arith.constant 0 : i32
    %c0_i32_0 = arith.constant 0 : i32
    return %c0_i32, %arg0 : i32, i32
  }
}

</mosaic_0001>

<llo_original>
// kernel: tpu_custom_call.1
$region0: #{tpu_custom_call.1}
  #allocation0 [shape = 'u32[]', space=smem, size = 0x4, offset = 0x4, fixed_abs, tag = 'smem constant byte address 0x4 - core index']
  #allocation1 [shape = 'u32[72,128]{1,0:T(1,128)}', space=vmem, size = 0x9000, scoped, tag = 'internal scratch']
  %s0 = inlined_call_operand.vmem [shape: f32[512,4], index: 0, kind: input, shape index: {}]
  %s1 = inlined_call_operand.vmem [shape: f32[32,4], index: 1, kind: input, shape index: {}]
  %s2 = inlined_call_operand.vmem [shape: f32[32,1], index: 2, kind: input, shape index: {}]
  %s3 = inlined_call_operand.vmem [shape: f32[32,32], index: 3, kind: input, shape index: {}]
  %s4 = inlined_call_operand.vmem [shape: f32[32,1], index: 4, kind: input, shape index: {}]
  %s5 = inlined_call_operand.vmem [shape: f32[2,32], index: 5, kind: input, shape index: {}]
  %s6 = inlined_call_operand.vmem [shape: f32[2,1], index: 6, kind: input, shape index: {}]
  %s7 = inlined_call_operand.hbm [shape: f32[2,512], index: 7, kind: output, shape index: {}]
  %s8 = sld [smem:[#allocation0]]
  $region38: #{tpu_custom_call.1} parent=0
    _
  %s10 = ssub.s32 1, %s8
  %s11 = scalar_select 0, %s10, %s8
  $region1: #{tpu_custom_call.1} parent=0
    #allocation2 [shape = 'u8[4096]{0}', space=vmem, size = 0x1000, scoped, tag = 'output window, operand 0, single buffered']
    #allocation3 [shape = 's32[1]{0}', space=sflag, size = 0x4, scoped, tag = 'scoped memory for tpu_custom_call.1']
    %12 = vsyncpa [#allocation3], 0
    // Predicated region
    $region2: #{tpu_custom_call.1} parent=1 // pred_check
      _
    $region3: #{tpu_custom_call.1} parent=1 // pred_check_branch
      %14 = sbr.rel (0) target = $region5
    $region4: #{tpu_custom_call.1} parent=1 // pred_region
      _
    $region5: #{tpu_custom_call.1} parent=1 // pred_fallthru
      _
    // Predicated region
    $region6: #{tpu_custom_call.1} parent=1 // pred_check
      _
    $region7: #{tpu_custom_call.1} parent=1 // pred_check_branch
      %16 = sbr.rel (0) target = $region9
    $region8: #{tpu_custom_call.1} parent=1 // pred_region
      _
    $region9: #{tpu_custom_call.1} parent=1 // pred_fallthru
      _
    // Predicated region
    $region10: #{tpu_custom_call.1} parent=1 // pred_check
      _
    $region11: #{tpu_custom_call.1} parent=1 // pred_check_branch
      %18 = sbr.rel (0) target = $region13
    $region12: #{tpu_custom_call.1} parent=1 // pred_region
      _
    $region13: #{tpu_custom_call.1} parent=1 // pred_fallthru
      _
    // Predicated region
    $region14: #{tpu_custom_call.1} parent=1 // pred_check
      _
    $region15: #{tpu_custom_call.1} parent=1 // pred_check_branch
      %20 = sbr.rel (0) target = $region17
    $region16: #{tpu_custom_call.1} parent=1 // pred_region
      _
    $region17: #{tpu_custom_call.1} parent=1 // pred_fallthru
      _
    // Predicated region
    $region18: #{tpu_custom_call.1} parent=1 // pred_check
      _
    $region19: #{tpu_custom_call.1} parent=1 // pred_check_branch
      %22 = sbr.rel (0) target = $region21
    $region20: #{tpu_custom_call.1} parent=1 // pred_region
      _
    $region21: #{tpu_custom_call.1} parent=1 // pred_fallthru
      _
    // Predicated region
    $region22: #{tpu_custom_call.1} parent=1 // pred_check
      _
    $region23: #{tpu_custom_call.1} parent=1 // pred_check_branch
      %24 = sbr.rel (0) target = $region25
    $region24: #{tpu_custom_call.1} parent=1 // pred_region
      _
    $region25: #{tpu_custom_call.1} parent=1 // pred_fallthru
      _
    // Predicated region
    $region26: #{tpu_custom_call.1} parent=1 // pred_check
      _
    $region27: #{tpu_custom_call.1} parent=1 // pred_check_branch
      %26 = sbr.rel (0) target = $region29
    $region28: #{tpu_custom_call.1} parent=1 // pred_region
      _
    $region29: #{tpu_custom_call.1} parent=1 // pred_fallthru
      _
    %v27 = vld [vmem:[%s1] sm:$0xff]
    %v28 = vld [vmem:[%s1 + $0x8] sm:$0xff]
    %v29 = vld [vmem:[%s1 + $0x10] sm:$0xff]
    %v30 = vld [vmem:[%s1 + $0x18] sm:$0xff]
    %v31 = vld [vmem:[%s0] sm:$0xff]
    %v32 = vld [vmem:[%s0 + $0x8] sm:$0xff]
    %v33 = vld [vmem:[%s0 + $0x10] sm:$0xff]
    %v34 = vld [vmem:[%s0 + $0x18] sm:$0xff]
    %v35 = vld [vmem:[%s0 + $0x20] sm:$0xff]
    %v36 = vld [vmem:[%s0 + $0x28] sm:$0xff]
    %v37 = vld [vmem:[%s0 + $0x30] sm:$0xff]
    %v38 = vld [vmem:[%s0 + $0x38] sm:$0xff]
    %v39 = vld [vmem:[%s0 + $0x40] sm:$0xff]
    %v40 = vld [vmem:[%s0 + $0x48] sm:$0xff]
    %v41 = vld [vmem:[%s0 + $0x50] sm:$0xff]
    %v42 = vld [vmem:[%s0 + $0x58] sm:$0xff]
    %v43 = vld [vmem:[%s0 + $0x60] sm:$0xff]
    %v44 = vld [vmem:[%s0 + $0x68] sm:$0xff]
    %v45 = vld [vmem:[%s0 + $0x70] sm:$0xff]
    %v46 = vld [vmem:[%s0 + $0x78] sm:$0xff]
    %v47 = vld [vmem:[%s0 + $0x80] sm:$0xff]
    %v48 = vld [vmem:[%s0 + $0x88] sm:$0xff]
    %v49 = vld [vmem:[%s0 + $0x90] sm:$0xff]
    %v50 = vld [vmem:[%s0 + $0x98] sm:$0xff]
    %v51 = vld [vmem:[%s0 + $0xa0] sm:$0xff]
    %v52 = vld [vmem:[%s0 + $0xa8] sm:$0xff]
    %v53 = vld [vmem:[%s0 + $0xb0] sm:$0xff]
    %v54 = vld [vmem:[%s0 + $0xb8] sm:$0xff]
    %v55 = vld [vmem:[%s0 + $0xc0] sm:$0xff]
    %v56 = vld [vmem:[%s0 + $0xc8] sm:$0xff]
    %v57 = vld [vmem:[%s0 + $0xd0] sm:$0xff]
    %v58 = vld [vmem:[%s0 + $0xd8] sm:$0xff]
    %v59 = vld [vmem:[%s0 + $0xe0] sm:$0xff]
    %v60 = vld [vmem:[%s0 + $0xe8] sm:$0xff]
    %v61 = vld [vmem:[%s0 + $0xf0] sm:$0xff]
    %v62 = vld [vmem:[%s0 + $0xf8] sm:$0xff]
    %v63 = vld [vmem:[%s0 + $0x100] sm:$0xff]
    %v64 = vld [vmem:[%s0 + $0x108] sm:$0xff]
    %v65 = vld [vmem:[%s0 + $0x110] sm:$0xff]
    %v66 = vld [vmem:[%s0 + $0x118] sm:$0xff]
    %v67 = vld [vmem:[%s0 + $0x120] sm:$0xff]
    %v68 = vld [vmem:[%s0 + $0x128] sm:$0xff]
    %v69 = vld [vmem:[%s0 + $0x130] sm:$0xff]
    %v70 = vld [vmem:[%s0 + $0x138] sm:$0xff]
    %v71 = vld [vmem:[%s0 + $0x140] sm:$0xff]
    %v72 = vld [vmem:[%s0 + $0x148] sm:$0xff]
    %v73 = vld [vmem:[%s0 + $0x150] sm:$0xff]
    %v74 = vld [vmem:[%s0 + $0x158] sm:$0xff]
    %v75 = vld [vmem:[%s0 + $0x160] sm:$0xff]
    %v76 = vld [vmem:[%s0 + $0x168] sm:$0xff]
    %v77 = vld [vmem:[%s0 + $0x170] sm:$0xff]
    %v78 = vld [vmem:[%s0 + $0x178] sm:$0xff]
    %v79 = vld [vmem:[%s0 + $0x180] sm:$0xff]
    %v80 = vld [vmem:[%s0 + $0x188] sm:$0xff]
    %v81 = vld [vmem:[%s0 + $0x190] sm:$0xff]
    %v82 = vld [vmem:[%s0 + $0x198] sm:$0xff]
    %v83 = vld [vmem:[%s0 + $0x1a0] sm:$0xff]
    %v84 = vld [vmem:[%s0 + $0x1a8] sm:$0xff]
    %v85 = vld [vmem:[%s0 + $0x1b0] sm:$0xff]
    %v86 = vld [vmem:[%s0 + $0x1b8] sm:$0xff]
    %v87 = vld [vmem:[%s0 + $0x1c0] sm:$0xff]
    %v88 = vld [vmem:[%s0 + $0x1c8] sm:$0xff]
    %v89 = vld [vmem:[%s0 + $0x1d0] sm:$0xff]
    %v90 = vld [vmem:[%s0 + $0x1d8] sm:$0xff]
    %v91 = vld [vmem:[%s0 + $0x1e0] sm:$0xff]
    %v92 = vld [vmem:[%s0 + $0x1e8] sm:$0xff]
    %v93 = vld [vmem:[%s0 + $0x1f0] sm:$0xff]
    %v94 = vld [vmem:[%s0 + $0x1f8] sm:$0xff]
    %v95 = vld [vmem:[%s2] sm:$0xff]
    %v96 = vld [vmem:[%s2 + $0x8] sm:$0xff]
    %v97 = vld [vmem:[%s2 + $0x10] sm:$0xff]
    %v98 = vld [vmem:[%s2 + $0x18] sm:$0xff]
    %100 = vset.pattern.permute.xlu0 0
    %101 = vperm.xlu0 %100, %v95
    %v102 = vpop.permute.xlu0 %101
    %105 = vset.pattern.permute.xlu0 0
    %106 = vperm.xlu0 %105, %v96
    %v107 = vpop.permute.xlu0 %106
    %110 = vset.pattern.permute.xlu0 0
    %111 = vperm.xlu0 %110, %v97
    %v112 = vpop.permute.xlu0 %111
    %115 = vset.pattern.permute.xlu0 0
    %116 = vperm.xlu0 %115, %v98
    %v117 = vpop.permute.xlu0 %116
    %vm119 = vcmask 31744
    %v121 = vsel %vm119, %v27, 0
    %v124 = vsel %vm119, %v28, 0
    %v127 = vsel %vm119, %v29, 0
    %v130 = vsel %vm119, %v30, 0
    %v133 = vsel %vm119, %v31, 0
    %v136 = vsel %vm119, %v32, 0
    %v139 = vsel %vm119, %v33, 0
    %v142 = vsel %vm119, %v34, 0
    %v145 = vsel %vm119, %v35, 0
    %v148 = vsel %vm119, %v36, 0
    %v151 = vsel %vm119, %v37, 0
    %v154 = vsel %vm119, %v38, 0
    %v157 = vsel %vm119, %v39, 0
    %v160 = vsel %vm119, %v40, 0
    %v163 = vsel %vm119, %v41, 0
    %v166 = vsel %vm119, %v42, 0
    %v169 = vsel %vm119, %v43, 0
    %v172 = vsel %vm119, %v44, 0
    %v175 = vsel %vm119, %v45, 0
    %v178 = vsel %vm119, %v46, 0
    %v181 = vsel %vm119, %v47, 0
    %v184 = vsel %vm119, %v48, 0
    %v187 = vsel %vm119, %v49, 0
    %v190 = vsel %vm119, %v50, 0
    %v193 = vsel %vm119, %v51, 0
    %v196 = vsel %vm119, %v52, 0
    %v199 = vsel %vm119, %v53, 0
    %v202 = vsel %vm119, %v54, 0
    %v205 = vsel %vm119, %v55, 0
    %v208 = vsel %vm119, %v56, 0
    %v211 = vsel %vm119, %v57, 0
    %v214 = vsel %vm119, %v58, 0
    %v217 = vsel %vm119, %v59, 0
    %v220 = vsel %vm119, %v60, 0
    %v223 = vsel %vm119, %v61, 0
    %v226 = vsel %vm119, %v62, 0
    %v229 = vsel %vm119, %v63, 0
    %v232 = vsel %vm119, %v64, 0
    %v235 = vsel %vm119, %v65, 0
    %v238 = vsel %vm119, %v66, 0
    %v241 = vsel %vm119, %v67, 0
    %v244 = vsel %vm119, %v68, 0
    %v247 = vsel %vm119, %v69, 0
    %v250 = vsel %vm119, %v70, 0
    %v253 = vsel %vm119, %v71, 0
    %v256 = vsel %vm119, %v72, 0
    %v259 = vsel %vm119, %v73, 0
    %v262 = vsel %vm119, %v74, 0
    %v265 = vsel %vm119, %v75, 0
    %v268 = vsel %vm119, %v76, 0
    %v271 = vsel %vm119, %v77, 0
    %v274 = vsel %vm119, %v78, 0
    %v277 = vsel %vm119, %v79, 0
    %v280 = vsel %vm119, %v80, 0
    %v283 = vsel %vm119, %v81, 0
    %v286 = vsel %vm119, %v82, 0
    %v289 = vsel %vm119, %v83, 0
    %v292 = vsel %vm119, %v84, 0
    %v295 = vsel %vm119, %v85, 0
    %v298 = vsel %vm119, %v86, 0
    %v301 = vsel %vm119, %v87, 0
    %v304 = vsel %vm119, %v88, 0
    %v307 = vsel %vm119, %v89, 0
    %v310 = vsel %vm119, %v90, 0
    %v313 = vsel %vm119, %v91, 0
    %v316 = vsel %vm119, %v92, 0
    %v319 = vsel %vm119, %v93, 0
    %v322 = vsel %vm119, %v94, 0
    %324 = vmatpush.xpose.msra.mxu0 %v178
    %325 = vmatpush.xpose.msra.mxu0 %v175
    %326 = vmatpush.xpose.msra.mxu0 %v172
    %327 = vmatpush.xpose.msra.mxu0 %v169
    %328 = vmatpush.xpose.msra.mxu0 %v166
    %329 = vmatpush.xpose.msra.mxu0 %v163
    %330 = vmatpush.xpose.msra.mxu0 %v160
    %331 = vmatpush.xpose.msra.mxu0 %v157
    %332 = vmatpush.xpose.msra.mxu0 %v154
    %333 = vmatpush.xpose.msra.mxu0 %v151
    %334 = vmatpush.xpose.msra.mxu0 %v148
    %335 = vmatpush.xpose.msra.mxu0 %v145
    %336 = vmatpush.xpose.msra.mxu0 %v142
    %337 = vmatpush.xpose.msra.mxu0 %v139
    %338 = vmatpush.xpose.msra.mxu0 %v136
    %339 = vmatpush.xpose.msra.mxu0 %v133
    %340 = vmatmul.f32.gmra.mxu0 %v121
    %v341 = vpop.f32.mrf.mxu0
    %v342 = vadd.f32 %v102, %v341
    %343 = vmatmul.f32.gmra.mxu0 %v124
    %v344 = vpop.f32.mrf.mxu0
    %v345 = vadd.f32 %v107, %v344
    %346 = vmatmul.f32.gmra.mxu0 %v127
    %v347 = vpop.f32.mrf.mxu0
    %v348 = vadd.f32 %v112, %v347
    %349 = vmatmul.f32.gmra.mxu0 %v130
    %v350 = vpop.f32.mrf.mxu0
    %v351 = vadd.f32 %v117, %v350
    %352 = vdwg.mxu0
    %353 = vmatpush.xpose.msra.mxu0 %v226
    %354 = vmatpush.xpose.msra.mxu0 %v223
    %355 = vmatpush.xpose.msra.mxu0 %v220
    %356 = vmatpush.xpose.msra.mxu0 %v217
    %357 = vmatpush.xpose.msra.mxu0 %v214
    %358 = vmatpush.xpose.msra.mxu0 %v211
    %359 = vmatpush.xpose.msra.mxu0 %v208
    %360 = vmatpush.xpose.msra.mxu0 %v205
    %361 = vmatpush.xpose.msra.mxu0 %v202
    %362 = vmatpush.xpose.msra.mxu0 %v199
    %363 = vmatpush.xpose.msra.mxu0 %v196
    %364 = vmatpush.xpose.msra.mxu0 %v193
    %365 = vmatpush.xpose.msra.mxu0 %v190
    %366 = vmatpush.xpose.msra.mxu0 %v187
    %367 = vmatpush.xpose.msra.mxu0 %v184
    %368 = vmatpush.xpose.msra.mxu0 %v181
    %369 = vmatmul.f32.gmra.mxu0 %v121
    %v370 = vpop.f32.mrf.mxu0
    %v371 = vadd.f32 %v102, %v370
    %372 = vmatmul.f32.gmra.mxu0 %v124
    %v373 = vpop.f32.mrf.mxu0
    %v374 = vadd.f32 %v107, %v373
    %375 = vmatmul.f32.gmra.mxu0 %v127
    %v376 = vpop.f32.mrf.mxu0
    %v377 = vadd.f32 %v112, %v376
    %378 = vmatmul.f32.gmra.mxu0 %v130
    %v379 = vpop.f32.mrf.mxu0
    %v380 = vadd.f32 %v117, %v379
    %381 = vdwg.mxu0
    %382 = vmatpush.xpose.msra.mxu0 %v274
    %383 = vmatpush.xpose.msra.mxu0 %v271
    %384 = vmatpush.xpose.msra.mxu0 %v268
    %385 = vmatpush.xpose.msra.mxu0 %v265
    %386 = vmatpush.xpose.msra.mxu0 %v262
    %387 = vmatpush.xpose.msra.mxu0 %v259
    %388 = vmatpush.xpose.msra.mxu0 %v256
    %389 = vmatpush.xpose.msra.mxu0 %v253
    %390 = vmatpush.xpose.msra.mxu0 %v250
    %391 = vmatpush.xpose.msra.mxu0 %v247
    %392 = vmatpush.xpose.msra.mxu0 %v244
    %393 = vmatpush.xpose.msra.mxu0 %v241
    %394 = vmatpush.xpose.msra.mxu0 %v238
    %395 = vmatpush.xpose.msra.mxu0 %v235
    %396 = vmatpush.xpose.msra.mxu0 %v232
    %397 = vmatpush.xpose.msra.mxu0 %v229
    %398 = vmatmul.f32.gmra.mxu0 %v121
    %v399 = vpop.f32.mrf.mxu0
    %v400 = vadd.f32 %v102, %v399
    %401 = vmatmul.f32.gmra.mxu0 %v124
    %v402 = vpop.f32.mrf.mxu0
    %v403 = vadd.f32 %v107, %v402
    %404 = vmatmul.f32.gmra.mxu0 %v127
    %v405 = vpop.f32.mrf.mxu0
    %v406 = vadd.f32 %v112, %v405
    %407 = vmatmul.f32.gmra.mxu0 %v130
    %v408 = vpop.f32.mrf.mxu0
    %v409 = vadd.f32 %v117, %v408
    %410 = vdwg.mxu0
    %411 = vmatpush.xpose.msra.mxu0 %v322
    %412 = vmatpush.xpose.msra.mxu0 %v319
    %413 = vmatpush.xpose.msra.mxu0 %v316
    %414 = vmatpush.xpose.msra.mxu0 %v313
    %415 = vmatpush.xpose.msra.mxu0 %v310
    %416 = vmatpush.xpose.msra.mxu0 %v307
    %417 = vmatpush.xpose.msra.mxu0 %v304
    %418 = vmatpush.xpose.msra.mxu0 %v301
    %419 = vmatpush.xpose.msra.mxu0 %v298
    %420 = vmatpush.xpose.msra.mxu0 %v295
    %421 = vmatpush.xpose.msra.mxu0 %v292
    %422 = vmatpush.xpose.msra.mxu0 %v289
    %423 = vmatpush.xpose.msra.mxu0 %v286
    %424 = vmatpush.xpose.msra.mxu0 %v283
    %425 = vmatpush.xpose.msra.mxu0 %v280
    %426 = vmatpush.xpose.msra.mxu0 %v277
    %427 = vmatmul.f32.gmra.mxu0 %v121
    %v428 = vpop.f32.mrf.mxu0
    %v429 = vadd.f32 %v102, %v428
    %430 = vmatmul.f32.gmra.mxu0 %v124
    %v431 = vpop.f32.mrf.mxu0
    %v432 = vadd.f32 %v107, %v431
    %433 = vmatmul.f32.gmra.mxu0 %v127
    %v434 = vpop.f32.mrf.mxu0
    %v435 = vadd.f32 %v112, %v434
    %436 = vmatmul.f32.gmra.mxu0 %v130
    %v437 = vpop.f32.mrf.mxu0
    %v438 = vadd.f32 %v117, %v437
    %439 = vdwg.mxu0
    %v440 = vtanh.pop %v342
    %v441 = vtanh.pop %v371
    %v442 = vtanh.pop %v400
    %v443 = vtanh.pop %v429
    %v444 = vtanh.pop %v345
    %v445 = vtanh.pop %v374
    %v446 = vtanh.pop %v403
    %v447 = vtanh.pop %v432
    %v448 = vtanh.pop %v348
    %v449 = vtanh.pop %v377
    %v450 = vtanh.pop %v406
    %v451 = vtanh.pop %v435
    %v452 = vtanh.pop %v351
    %v453 = vtanh.pop %v380
    %v454 = vtanh.pop %v409
    %v455 = vtanh.pop %v438
    %v456 = vld [vmem:[%s3] sm:$0xff]
    %v457 = vld [vmem:[%s3 + $0x8] sm:$0xff]
    %v458 = vld [vmem:[%s3 + $0x10] sm:$0xff]
    %v459 = vld [vmem:[%s3 + $0x18] sm:$0xff]
    %v460 = vld [vmem:[%s4] sm:$0xff]
    %v461 = vld [vmem:[%s4 + $0x8] sm:$0xff]
    %v462 = vld [vmem:[%s4 + $0x10] sm:$0xff]
    %v463 = vld [vmem:[%s4 + $0x18] sm:$0xff]
    %465 = vset.pattern.permute.xlu0 0
    %466 = vperm.xlu0 %465, %v460
    %v467 = vpop.permute.xlu0 %466
    %470 = vset.pattern.permute.xlu0 0
    %471 = vperm.xlu0 %470, %v461
    %v472 = vpop.permute.xlu0 %471
    %475 = vset.pattern.permute.xlu0 0
    %476 = vperm.xlu0 %475, %v462
    %v477 = vpop.permute.xlu0 %476
    %480 = vset.pattern.permute.xlu0 0
    %481 = vperm.xlu0 %480, %v463
    %v482 = vpop.permute.xlu0 %481
    %vm484 = vcmask 261120
    %v486 = vsel %vm484, %v456, 0
    %v489 = vsel %vm484, %v457, 0
    %v492 = vsel %vm484, %v458, 0
    %v495 = vsel %vm484, %v459, 0
    %497 = vmatpush.msra.mxu0 0.0
    %498 = vmatpush.msra.mxu0 0.0
    %499 = vmatpush.msra.mxu0 0.0
    %500 = vmatpush.msra.mxu0 0.0
    %501 = vmatpush.msra.mxu0 0.0
    %502 = vmatpush.msra.mxu0 0.0
    %503 = vmatpush.msra.mxu0 0.0
    %504 = vmatpush.msra.mxu0 0.0
    %505 = vmatpush.msra.mxu0 0.0
    %506 = vmatpush.msra.mxu0 0.0
    %507 = vmatpush.msra.mxu0 0.0
    %508 = vmatpush.msra.mxu0 0.0
    %509 = vmatpush.msra.mxu0 %v452
    %510 = vmatpush.msra.mxu0 %v448
    %511 = vmatpush.msra.mxu0 %v444
    %512 = vmatpush.msra.mxu0 %v440
    %513 = vmatmul.f32.gmra.mxu0 %v486
    %v514 = vpop.f32.mrf.mxu0
    %v515 = vadd.f32 %v467, %v514
    %516 = vmatmul.f32.gmra.mxu0 %v489
    %v517 = vpop.f32.mrf.mxu0
    %v518 = vadd.f32 %v472, %v517
    %519 = vmatmul.f32.gmra.mxu0 %v492
    %v520 = vpop.f32.mrf.mxu0
    %v521 = vadd.f32 %v477, %v520
    %522 = vmatmul.f32.gmra.mxu0 %v495
    %v523 = vpop.f32.mrf.mxu0
    %v524 = vadd.f32 %v482, %v523
    %525 = vdwg.mxu0
    %526 = vmatpush.msra.mxu0 0.0
    %527 = vmatpush.msra.mxu0 0.0
    %528 = vmatpush.msra.mxu0 0.0
    %529 = vmatpush.msra.mxu0 0.0
    %530 = vmatpush.msra.mxu0 0.0
    %531 = vmatpush.msra.mxu0 0.0
    %532 = vmatpush.msra.mxu0 0.0
    %533 = vmatpush.msra.mxu0 0.0
    %534 = vmatpush.msra.mxu0 0.0
    %535 = vmatpush.msra.mxu0 0.0
    %536 = vmatpush.msra.mxu0 0.0
    %537 = vmatpush.msra.mxu0 0.0
    %538 = vmatpush.msra.mxu0 %v453
    %539 = vmatpush.msra.mxu0 %v449
    %540 = vmatpush.msra.mxu0 %v445
    %541 = vmatpush.msra.mxu0 %v441
    %542 = vmatmul.f32.gmra.mxu0 %v486
    %v543 = vpop.f32.mrf.mxu0
    %v544 = vadd.f32 %v467, %v543
    %545 = vmatmul.f32.gmra.mxu0 %v489
    %v546 = vpop.f32.mrf.mxu0
    %v547 = vadd.f32 %v472, %v546
    %548 = vmatmul.f32.gmra.mxu0 %v492
    %v549 = vpop.f32.mrf.mxu0
    %v550 = vadd.f32 %v477, %v549
    %551 = vmatmul.f32.gmra.mxu0 %v495
    %v552 = vpop.f32.mrf.mxu0
    %v553 = vadd.f32 %v482, %v552
    %554 = vdwg.mxu0
    %555 = vmatpush.msra.mxu0 0.0
    %556 = vmatpush.msra.mxu0 0.0
    %557 = vmatpush.msra.mxu0 0.0
    %558 = vmatpush.msra.mxu0 0.0
    %559 = vmatpush.msra.mxu0 0.0
    %560 = vmatpush.msra.mxu0 0.0
    %561 = vmatpush.msra.mxu0 0.0
    %562 = vmatpush.msra.mxu0 0.0
    %563 = vmatpush.msra.mxu0 0.0
    %564 = vmatpush.msra.mxu0 0.0
    %565 = vmatpush.msra.mxu0 0.0
    %566 = vmatpush.msra.mxu0 0.0
    %567 = vmatpush.msra.mxu0 %v454
    %568 = vmatpush.msra.mxu0 %v450
    %569 = vmatpush.msra.mxu0 %v446
    %570 = vmatpush.msra.mxu0 %v442
    %571 = vmatmul.f32.gmra.mxu0 %v486
    %v572 = vpop.f32.mrf.mxu0
    %v573 = vadd.f32 %v467, %v572
    %574 = vmatmul.f32.gmra.mxu0 %v489
    %v575 = vpop.f32.mrf.mxu0
    %v576 = vadd.f32 %v472, %v575
    %577 = vmatmul.f32.gmra.mxu0 %v492
    %v578 = vpop.f32.mrf.mxu0
    %v579 = vadd.f32 %v477, %v578
    %580 = vmatmul.f32.gmra.mxu0 %v495
    %v581 = vpop.f32.mrf.mxu0
    %v582 = vadd.f32 %v482, %v581
    %583 = vdwg.mxu0
    %584 = vmatpush.msra.mxu0 0.0
    %585 = vmatpush.msra.mxu0 0.0
    %586 = vmatpush.msra.mxu0 0.0
    %587 = vmatpush.msra.mxu0 0.0
    %588 = vmatpush.msra.mxu0 0.0
    %589 = vmatpush.msra.mxu0 0.0
    %590 = vmatpush.msra.mxu0 0.0
    %591 = vmatpush.msra.mxu0 0.0
    %592 = vmatpush.msra.mxu0 0.0
    %593 = vmatpush.msra.mxu0 0.0
    %594 = vmatpush.msra.mxu0 0.0
    %595 = vmatpush.msra.mxu0 0.0
    %596 = vmatpush.msra.mxu0 %v455
    %597 = vmatpush.msra.mxu0 %v451
    %598 = vmatpush.msra.mxu0 %v447
    %599 = vmatpush.msra.mxu0 %v443
    %600 = vmatmul.f32.gmra.mxu0 %v486
    %v601 = vpop.f32.mrf.mxu0
    %v602 = vadd.f32 %v467, %v601
    %603 = vmatmul.f32.gmra.mxu0 %v489
    %v604 = vpop.f32.mrf.mxu0
    %v605 = vadd.f32 %v472, %v604
    %606 = vmatmul.f32.gmra.mxu0 %v492
    %v607 = vpop.f32.mrf.mxu0
    %v608 = vadd.f32 %v477, %v607
    %609 = vmatmul.f32.gmra.mxu0 %v495
    %v610 = vpop.f32.mrf.mxu0
    %v611 = vadd.f32 %v482, %v610
    %612 = vdwg.mxu0
    %v613 = vtanh.pop %v515
    %v614 = vtanh.pop %v544
    %v615 = vtanh.pop %v573
    %v616 = vtanh.pop %v602
    %v617 = vtanh.pop %v518
    %v618 = vtanh.pop %v547
    %v619 = vtanh.pop %v576
    %v620 = vtanh.pop %v605
    %v621 = vtanh.pop %v521
    %v622 = vtanh.pop %v550
    %v623 = vtanh.pop %v579
    %v624 = vtanh.pop %v608
    %v625 = vtanh.pop %v524
    %v626 = vtanh.pop %v553
    %v627 = vtanh.pop %v582
    %v628 = vtanh.pop %v611
    %v629 = vld [vmem:[%s5] sm:$0x3]
    %v630 = vld [vmem:[%s6] sm:$0x3]
    %632 = vset.pattern.permute.xlu0 0
    %633 = vperm.xlu0 %632, %v630
    %v634 = vpop.permute.xlu0 %633
    %v637 = vsel %vm484, %v629, 0
    %639 = vmatpush.msra.mxu0 0.0
    %640 = vmatpush.msra.mxu0 0.0
    %641 = vmatpush.msra.mxu0 0.0
    %642 = vmatpush.msra.mxu0 0.0
    %643 = vmatpush.msra.mxu0 0.0
    %644 = vmatpush.msra.mxu0 0.0
    %645 = vmatpush.msra.mxu0 0.0
    %646 = vmatpush.msra.mxu0 0.0
    %647 = vmatpush.msra.mxu0 0.0
    %648 = vmatpush.msra.mxu0 0.0
    %649 = vmatpush.msra.mxu0 0.0
    %650 = vmatpush.msra.mxu0 0.0
    %651 = vmatpush.msra.mxu0 %v625
    %652 = vmatpush.msra.mxu0 %v621
    %653 = vmatpush.msra.mxu0 %v617
    %654 = vmatpush.msra.mxu0 %v613
    %655 = vmatmul.f32.gmra.mxu0 %v637
    %v656 = vpop.f32.mrf.mxu0
    %v657 = vadd.f32 %v634, %v656
    %658 = vdwg.mxu0
    %659 = vmatpush.msra.mxu0 0.0
    %660 = vmatpush.msra.mxu0 0.0
    %661 = vmatpush.msra.mxu0 0.0
    %662 = vmatpush.msra.mxu0 0.0
    %663 = vmatpush.msra.mxu0 0.0
    %664 = vmatpush.msra.mxu0 0.0
    %665 = vmatpush.msra.mxu0 0.0
    %666 = vmatpush.msra.mxu0 0.0
    %667 = vmatpush.msra.mxu0 0.0
    %668 = vmatpush.msra.mxu0 0.0
    %669 = vmatpush.msra.mxu0 0.0
    %670 = vmatpush.msra.mxu0 0.0
    %671 = vmatpush.msra.mxu0 %v626
    %672 = vmatpush.msra.mxu0 %v622
    %673 = vmatpush.msra.mxu0 %v618
    %674 = vmatpush.msra.mxu0 %v614
    %675 = vmatmul.f32.gmra.mxu0 %v637
    %v676 = vpop.f32.mrf.mxu0
    %v677 = vadd.f32 %v634, %v676
    %678 = vdwg.mxu0
    %679 = vmatpush.msra.mxu0 0.0
    %680 = vmatpush.msra.mxu0 0.0
    %681 = vmatpush.msra.mxu0 0.0
    %682 = vmatpush.msra.mxu0 0.0
    %683 = vmatpush.msra.mxu0 0.0
    %684 = vmatpush.msra.mxu0 0.0
    %685 = vmatpush.msra.mxu0 0.0
    %686 = vmatpush.msra.mxu0 0.0
    %687 = vmatpush.msra.mxu0 0.0
    %688 = vmatpush.msra.mxu0 0.0
    %689 = vmatpush.msra.mxu0 0.0
    %690 = vmatpush.msra.mxu0 0.0
    %691 = vmatpush.msra.mxu0 %v627
    %692 = vmatpush.msra.mxu0 %v623
    %693 = vmatpush.msra.mxu0 %v619
    %694 = vmatpush.msra.mxu0 %v615
    %695 = vmatmul.f32.gmra.mxu0 %v637
    %v696 = vpop.f32.mrf.mxu0
    %v697 = vadd.f32 %v634, %v696
    %698 = vdwg.mxu0
    %699 = vmatpush.msra.mxu0 0.0
    %700 = vmatpush.msra.mxu0 0.0
    %701 = vmatpush.msra.mxu0 0.0
    %702 = vmatpush.msra.mxu0 0.0
    %703 = vmatpush.msra.mxu0 0.0
    %704 = vmatpush.msra.mxu0 0.0
    %705 = vmatpush.msra.mxu0 0.0
    %706 = vmatpush.msra.mxu0 0.0
    %707 = vmatpush.msra.mxu0 0.0
    %708 = vmatpush.msra.mxu0 0.0
    %709 = vmatpush.msra.mxu0 0.0
    %710 = vmatpush.msra.mxu0 0.0
    %711 = vmatpush.msra.mxu0 %v628
    %712 = vmatpush.msra.mxu0 %v624
    %713 = vmatpush.msra.mxu0 %v620
    %714 = vmatpush.msra.mxu0 %v616
    %715 = vmatmul.f32.gmra.mxu0 %v637
    %v716 = vpop.f32.mrf.mxu0
    %v717 = vadd.f32 %v634, %v716
    %718 = vdwg.mxu0
    %v723 = vrot.slane %v677, 6
    %v724 = vrot.slane %v697, 4
    %v725 = vrot.slane %v717, 2
    %vm726 = vcmask 1041408
    %v727 = vsel %vm726, %v657, %v723
    %vm728 = vcmask 1045508
    %v729 = vsel %vm728, %v724, %v725
    %vm730 = vcmask 1043456
    %v731 = vsel %vm730, %v727, %v729
    %733 = vst [vmem:[#allocation2] sm:$0xff] %v731
    // Predicated region
    $region30: #{tpu_custom_call.1} parent=1 // pred_check
      _
    $region31: #{tpu_custom_call.1} parent=1 // pred_check_branch
      %735 = sbr.rel (0) target = $region33
    $region32: #{tpu_custom_call.1} parent=1 // pred_region
      %737 = vsyncadd [#allocation3], 0
      %s739 = sshll.u32 [#allocation2], 4
      %s740 = int_to_ptr.vmem [resolvable:$true] %s739
      %s741 = sshll.u32 %s7, 4
      %s742 = int_to_ptr.hbm [resolvable:$true] %s741
      %744 = dma.vmem_to_hbm [thread:$0]  %s740, 128, %s742, [#allocation3]
    $region33: #{tpu_custom_call.1} parent=1 // pred_fallthru
      _
    // Predicated region
    $region34: #{tpu_custom_call.1} parent=1 // pred_check
      _
    $region35: #{tpu_custom_call.1} parent=1 // pred_check_branch
      %746 = sbr.rel (0) target = $region37
    $region36: #{tpu_custom_call.1} parent=1 // pred_region
      %748 = dma.done [#allocation3], 128
    $region37: #{tpu_custom_call.1} parent=1 // pred_fallthru
      _
    %749 = vsyncpa [#allocation3], 1

</llo_original>
